<compile_context>
chip_gen: v7x
topology: tpu7x:2x2x1
jax: 0.10.0
libtpu: 0.0.40
codegen_flags: <defaults>
</compile_context>

<pallas_src>
import jax
import jax.numpy as jnp
from jax import lax
from jax.experimental import pallas as pl
from jax.experimental.pallas import tpu as pltpu

LANES = 128        # vreg lane width (last dim of every tile)
TILE_ROWS = 2048   # rows of 128 lanes per grid step (sweepable: 512-4096)
NCHUNKS = 2        # leading "parallel" grid axis (covers v7x's 2 TensorCores)


def _cid_loss_kernel(n_ref, a_ref, b_ref, o_ref, acc_ref):
    """One (block_rows, 128) tile of the reduction.

    n_ref   : SMEM (1,) int32   -- true element count (scalar prefetch)
    a_ref   : VMEM tile of log_ppd_2match (native dtype)
    b_ref   : VMEM tile of log_ppd        (native dtype)
    o_ref   : VMEM (1, acc_rows, 128) partial-sum block (one per chunk)
    acc_ref : VMEM (acc_rows, 128) f32 running accumulator (per core)
    """
    c = pl.program_id(0)          # chunk (parallel axis)
    t = pl.program_id(1)          # tile within the chunk (sequential axis)
    t_steps = pl.num_programs(1)

    @pl.when(t == 0)
    def _init():
        acc_ref[...] = jnp.zeros_like(acc_ref)

    a = a_ref[...].astype(jnp.float32)
    b = b_ref[...].astype(jnp.float32)
    val = (b - a) * jnp.exp(b)            # VPU sub/mul + EUP exp

    # Mask out-of-range elements: covers (i) garbage rows of a partial final
    # block, (ii) duplicate tiles produced by the clamped index_map, and
    # (iii) any wrapper-side alignment padding.  Cheap VPU work, fully hidden
    # under the HBM-bound roofline.
    block_rows = a_ref.shape[0]
    blk = c * t_steps + t                 # logical (unclamped) row-block index
    row_i = lax.broadcasted_iota(jnp.int32, val.shape, 0)
    lane_i = lax.broadcasted_iota(jnp.int32, val.shape, 1)
    gidx = (blk * block_rows + row_i) * LANES + lane_i
    val = jnp.where(gidx < n_ref[0], val, 0.0)

    # Vector accumulation: pure VPU adds into a small VMEM accumulator.
    acc_rows = acc_ref.shape[0]
    if acc_rows == 8 and block_rows % 8 == 0:
        acc_ref[...] += val.reshape(block_rows // 8, 8, LANES).sum(axis=0)
    else:
        acc_ref[...] += jnp.sum(val, axis=0, keepdims=True)

    @pl.when(t == t_steps - 1)
    def _finalize():
        o_ref[0, :, :] = acc_ref[...]


def cid_loss(log_ppd_2match: jax.Array, log_ppd: jax.Array) -> jax.Array:
    """Pallas implementation of mean((log_ppd - log_ppd_2match) * exp(log_ppd))."""
    assert log_ppd_2match.shape == log_ppd.shape, "shape mismatch"
    n = int(log_ppd.size)
    if n == 0:
        return jnp.float32(jnp.nan)  # matches torch .mean() on an empty tensor

    a = jnp.ravel(log_ppd_2match)    # native dtype; cast happens in-kernel
    b = jnp.ravel(log_ppd)

    # Lane-dense (rows, 128) view.  Free reshape when n % 128 == 0; otherwise
    # pad once to a multiple of 8*128 (pad values are masked in-kernel anyway).
    if n % LANES != 0:
        blk_elems = 8 * LANES
        padded = ((n + blk_elems - 1) // blk_elems) * blk_elems
        a = jnp.pad(a, (0, padded - n))
        b = jnp.pad(b, (0, padded - n))
    else:
        padded = n

    rows = padded // LANES
    a2 = a.reshape(rows, LANES)
    b2 = b.reshape(rows, LANES)

    block_rows = min(TILE_ROWS, rows)          # full-extent block if input is small
    acc_rows = 8 if block_rows % 8 == 0 else 1
    total_tiles = (rows + block_rows - 1) // block_rows
    nchunks = NCHUNKS if total_tiles >= NCHUNKS else 1
    inner = (total_tiles + nchunks - 1) // nchunks
    last_block = total_tiles - 1

    def tile_index(c, t, n_ref):
        # Clamp so DMAs never start past the end of the array; clamped
        # (duplicate) tiles contribute exactly zero via the in-kernel mask.
        return (jnp.minimum(c * inner + t, last_block), 0)

    in_spec = pl.BlockSpec((block_rows, LANES), tile_index)
    out_spec = pl.BlockSpec((1, acc_rows, LANES), lambda c, t, n_ref: (c, 0, 0))

    partials = pl.pallas_call(
        _cid_loss_kernel,
        out_shape=jax.ShapeDtypeStruct((nchunks, acc_rows, LANES), jnp.float32),
        grid_spec=pltpu.PrefetchScalarGridSpec(
            num_scalar_prefetch=1,
            grid=(nchunks, inner),
            in_specs=[in_spec, in_spec],
            out_specs=out_spec,
            scratch_shapes=[pltpu.VMEM((acc_rows, LANES), jnp.float32)],
        ),
        compiler_params=pltpu.CompilerParams(
            dimension_semantics=("parallel", "arbitrary"),
        ),
    )(jnp.asarray([n], dtype=jnp.int32), a2, b2)

    # One tiny cross-lane reduce + divide, outside the hot loop.
    return jnp.sum(partials) / jnp.float32(n)


def _reference(log_ppd_2match, log_ppd):
    a = log_ppd_2match.astype(jnp.float32)
    b = log_ppd.astype(jnp.float32)
    return jnp.mean((b - a) * jnp.exp(b))


if __name__ == "__main__":
    key = jax.random.PRNGKey(0)

    def make_pair(k, shape, dtype=jnp.float32):
        k1, k2 = jax.random.split(k)
        a = (jax.random.normal(k1, shape, dtype=jnp.float32) * 0.5 - 1.0).astype(dtype)
        b = (jax.random.normal(k2, shape, dtype=jnp.float32) * 0.5 - 1.0).astype(dtype)
        return a, b

    k0, k1, k2 = jax.random.split(key, 3)

    # Primary small case (mimics (batch, points, dim, ...) log-ppd tensors).
    a0, b0 = make_pair(k0, (2, 4, 16, 16))
    loss0 = jax.block_until_ready(cid_loss(a0, b0))
    ref0 = _reference(a0, b0)
    assert jnp.allclose(loss0, ref0, rtol=1e-4, atol=1e-5), (loss0, ref0)

    # Ragged size: exercises the minimal-pad + in-kernel masking path.
    a1, b1 = make_pair(k1, (3, 5, 7))
    loss1 = jax.block_until_ready(cid_loss(a1, b1))
    ref1 = _reference(a1, b1)
    assert jnp.allclose(loss1, ref1, rtol=1e-4, atol=1e-5), (loss1, ref1)

    # Multi-tile case: 2 parallel chunks, odd tile count (clamped duplicate
    # tile) and a partial final row-block -- all masked paths, no padding.
    a2_, b2_ = make_pair(k2, (6 * TILE_ROWS + 100, LANES))
    loss2 = jax.block_until_ready(cid_loss(a2_, b2_))
    ref2 = _reference(a2_, b2_)
    assert jnp.allclose(loss2, ref2, rtol=1e-4, atol=1e-5), (loss2, ref2)

    print("KERNEL_OK")
</pallas_src>

<mosaic_0001>
module attributes {stable_mosaic.version = 11 : i64} {
  func.func @_cid_loss_kernel(%arg0: i32, %arg1: i32, %arg2: memref<1xi32, #tpu.memory_space<smem>>, %arg3: memref<16x128xf32, #tpu.memory_space<vmem>>, %arg4: memref<16x128xf32, #tpu.memory_space<vmem>>, %arg5: memref<1x8x128xf32, #tpu.memory_space<vmem>>, %arg6: memref<8x128xf32, #tpu.memory_space<vmem>>) attributes {dimension_semantics = [#tpu.dimension_semantics<parallel>, #tpu.dimension_semantics<arbitrary>], iteration_bounds = array<i64: 1, 1>, scalar_prefetch = 1 : i64, scratch_operands = 1 : i64, tpu.core_type = #tpu.core_type<tc>, window_params = [{transform_indices = @transform_0, window_bounds = array<i64: 16, 128>}, {transform_indices = @transform_1, window_bounds = array<i64: 16, 128>}, {transform_indices = @transform_2, window_bounds = array<i64: 1, 8, 128>}]} {
    %c0_i32 = arith.constant 0 : i32
    %0 = arith.cmpi eq, %arg1, %c0_i32 : i32
    %1 = arith.extui %0 : i1 to i32
    %c0_i32_0 = arith.constant 0 : i32
    %2 = arith.cmpi ne, %1, %c0_i32_0 : i32
    scf.if %2 {
      %cst_12 = arith.constant 0.000000e+00 : f32
      %31 = vector.broadcast %cst_12 : f32 to vector<8x128xf32>
      %c0_13 = arith.constant 0 : index
      %c0_14 = arith.constant 0 : index
      %32 = vector.load %arg6[%c0_13, %c0_14] : memref<8x128xf32, #tpu.memory_space<vmem>>, vector<8x128xf32>
      tpu.vector_store %arg6[%c0_13, %c0_14], %31 {strides = array<i32>} : memref<8x128xf32, #tpu.memory_space<vmem>>, vector<8x128xf32>,
    } else {
    }
    %c0 = arith.constant 0 : index
    %c0_1 = arith.constant 0 : index
    %3 = vector.load %arg3[%c0, %c0_1] : memref<16x128xf32, #tpu.memory_space<vmem>>, vector<16x128xf32>
    %c0_2 = arith.constant 0 : index
    %c0_3 = arith.constant 0 : index
    %4 = vector.load %arg4[%c0_2, %c0_3] : memref<16x128xf32, #tpu.memory_space<vmem>>, vector<16x128xf32>
    %5 = arith.subf %4, %3 : vector<16x128xf32>
    %6 = math.exp %4 : vector<16x128xf32>
    %7 = arith.mulf %5, %6 : vector<16x128xf32>
    %c1_i32 = arith.constant 1 : i32
    %8 = arith.muli %arg0, %c1_i32 : i32
    %9 = arith.addi %8, %arg1 : i32
    %10 = tpu.iota {dimensions = array<i32: 0>} : vector<16x128xi32>
    %11 = tpu.iota {dimensions = array<i32: 1>} : vector<16x128xi32>
    %c16_i32 = arith.constant 16 : i32
    %12 = arith.muli %9, %c16_i32 : i32
    %13 = vector.broadcast %12 : i32 to vector<16x128xi32>
    %14 = arith.addi %13, %10 : vector<16x128xi32>
    %c128_i32 = arith.constant 128 : i32
    %15 = vector.broadcast %c128_i32 : i32 to vector<16x128xi32>
    %16 = arith.muli %14, %15 : vector<16x128xi32>
    %17 = arith.addi %16, %11 : vector<16x128xi32>
    %c0_4 = arith.constant 0 : index
    %18 = memref.load %arg2[%c0_4] : memref<1xi32, #tpu.memory_space<smem>>
    %19 = vector.broadcast %18 : i32 to vector<16x128xi32>
    %20 = arith.cmpi slt, %17, %19 : vector<16x128xi32>
    %cst = arith.constant 0.000000e+00 : f32
    %21 = vector.broadcast %cst : f32 to vector<16x128xf32>
    %22 = arith.select %20, %7, %21 : vector<16x128xi1>, vector<16x128xf32>
    %c0_5 = arith.constant 0 : index
    %c0_6 = arith.constant 0 : index
    %23 = vector.load %arg6[%c0_5, %c0_6] : memref<8x128xf32, #tpu.memory_space<vmem>>, vector<8x128xf32>
    %24 = vector.shape_cast %22 : vector<16x128xf32> to vector<2x8x128xf32>
    %cst_7 = arith.constant dense<0.000000e+00> : vector<8x128xf32>
    %25 = vector.multi_reduction <add>, %24, %cst_7 [0] : vector<2x8x128xf32> to vector<8x128xf32>
    %26 = arith.addf %23, %25 : vector<8x128xf32>
    %c0_8 = arith.constant 0 : index
    %c0_9 = arith.constant 0 : index
    %27 = vector.load %arg6[%c0_8, %c0_9] : memref<8x128xf32, #tpu.memory_space<vmem>>, vector<8x128xf32>
    tpu.vector_store %arg6[%c0_8, %c0_9], %26 {strides = array<i32>} : memref<8x128xf32, #tpu.memory_space<vmem>>, vector<8x128xf32>,
    %c0_i32_10 = arith.constant 0 : i32
    %28 = arith.cmpi eq, %arg1, %c0_i32_10 : i32
    %29 = arith.extui %28 : i1 to i32
    %c0_i32_11 = arith.constant 0 : i32
    %30 = arith.cmpi ne, %29, %c0_i32_11 : i32
    scf.if %30 {
      %c0_12 = arith.constant 0 : index
      %c0_13 = arith.constant 0 : index
      %31 = vector.load %arg6[%c0_12, %c0_13] : memref<8x128xf32, #tpu.memory_space<vmem>>, vector<8x128xf32>
      %c0_14 = arith.constant 0 : index
      %c0_15 = arith.constant 0 : index
      %c0_16 = arith.constant 0 : index
      %32 = vector.load %arg5[%c0_14, %c0_15, %c0_16] : memref<1x8x128xf32, #tpu.memory_space<vmem>>, vector<1x8x128xf32>
      %33 = vector.shape_cast %32 : vector<1x8x128xf32> to vector<8x128xf32>
      %34 = vector.shape_cast %31 : vector<8x128xf32> to vector<1x8x128xf32>
      tpu.vector_store %arg5[%c0_14, %c0_15, %c0_16], %34 {strides = array<i32>} : memref<1x8x128xf32, #tpu.memory_space<vmem>>, vector<1x8x128xf32>,
    } else {
    }
    return
  }
  func.func @transform_0(%arg0: i32, %arg1: i32, %arg2: memref<1xi32, #tpu.memory_space<smem>>) -> (i32, i32) {
    %c1_i32 = arith.constant 1 : i32
    %0 = arith.muli %arg0, %c1_i32 : i32
    %1 = arith.addi %0, %arg1 : i32
    %c0_i32 = arith.constant 0 : i32
    %2 = arith.minsi %1, %c0_i32 : i32
    %c0_i32_0 = arith.constant 0 : i32
    %c0_i32_1 = arith.constant 0 : i32
    return %2, %c0_i32_0 : i32, i32
  }
  func.func @transform_1(%arg0: i32, %arg1: i32, %arg2: memref<1xi32, #tpu.memory_space<smem>>) -> (i32, i32) {
    %c1_i32 = arith.constant 1 : i32
    %0 = arith.muli %arg0, %c1_i32 : i32
    %1 = arith.addi %0, %arg1 : i32
    %c0_i32 = arith.constant 0 : i32
    %2 = arith.minsi %1, %c0_i32 : i32
    %c0_i32_0 = arith.constant 0 : i32
    %c0_i32_1 = arith.constant 0 : i32
    return %2, %c0_i32_0 : i32, i32
  }
  func.func @transform_2(%arg0: i32, %arg1: i32, %arg2: memref<1xi32, #tpu.memory_space<smem>>) -> (i32, i32, i32) {
    %c0_i32 = arith.constant 0 : i32
    %c0_i32_0 = arith.constant 0 : i32
    %c0_i32_1 = arith.constant 0 : i32
    return %arg0, %c0_i32, %c0_i32_0 : i32, i32, i32
  }
}

</mosaic_0001>

<llo_original>
// kernel: tpu_custom_call.1
$region0: #{tpu_custom_call.1}
  #allocation0 [shape = 'u32[]', space=smem, size = 0x4, offset = 0x4, fixed_abs, tag = 'smem constant byte address 0x4 - core index']
  #allocation1 [shape = 'u32[144,128]{1,0:T(1,128)}', space=vmem, size = 0x12000, scoped, tag = 'internal scratch']
  #allocation2 [shape = 'f32[8,128]{1,0:T(8,128)}', space=vmem, size = 0x1000, scoped, tag = 'scratch operand']
  #allocation3 [shape = 's32[1]{0}', space=sflag, size = 0x4, scoped, tag = 'scoped memory for tpu_custom_call.1']
  #allocation4 [shape = 's32[1]{0:T(128)S(6)}', space=smem, size = 0x200, scoped, tag = 'prefetched SMEM operand 0']
  %s0 = inlined_call_operand.<no memory space> [shape: s32[1], index: 0, kind: input, shape index: {}]
  %s1 = inlined_call_operand.hbm [shape: f32[16,128], index: 1, kind: input, shape index: {}]
  %s2 = inlined_call_operand.hbm [shape: f32[16,128], index: 2, kind: input, shape index: {}]
  %s3 = inlined_call_operand.hbm [shape: f32[1,8,128], index: 3, kind: output, shape index: {}]
  %s4 = sld [smem:[#allocation0]]
  $region34: #{tpu_custom_call.1} parent=0
    _
  %s6 = ssub.s32 1, %s4
  %s7 = scalar_select 0, %s6, %s4
  %8 = sst [smem:[#allocation4]] %s0
  $region1: #{tpu_custom_call.1} parent=0
    #allocation5 [shape = 'u8[8192]{0}', space=vmem, size = 0x2000, scoped, tag = 'input window, operand 1, single buffered']
    #allocation6 [shape = 's32[1]{0}', space=sflag, size = 0x4, scoped, tag = 'scoped memory for tpu_custom_call.1']
    #allocation7 [shape = 's32[1]{0}', space=sflag, size = 0x4, scoped, tag = 'scoped memory for tpu_custom_call.1']
    #allocation8 [shape = 'u8[8192]{0}', space=vmem, size = 0x2000, scoped, tag = 'input window, operand 2, single buffered']
    #allocation9 [shape = 's32[1]{0}', space=sflag, size = 0x4, scoped, tag = 'scoped memory for tpu_custom_call.1']
    #allocation10 [shape = 'u8[4096]{0}', space=vmem, size = 0x1000, scoped, tag = 'output window, operand 0, single buffered']
    %9 = vsyncpa [#allocation6], 0
    %10 = vsyncpa [#allocation9], 0
    %11 = vsyncpa [#allocation7], 0
    // Predicated region
    $region2: #{tpu_custom_call.1} parent=1 // pred_check
      _
    $region3: #{tpu_custom_call.1} parent=1 // pred_check_branch
      %13 = sbr.rel (0) target = $region5
    $region4: #{tpu_custom_call.1} parent=1 // pred_region
      %s14 = sadd.s32 0, 0
      %p15 = scmp.lt.s32.totalorder %s14, 0
      %s16 = scalar_select %p15, %s14, 0
      %s17 = smul.u32 2, %s16
      %s19 = ssub.s32 256, 256
      %20 = vsyncadd [#allocation6], %s19
      %s21 = smul.addr %s17, 128
      %s22 = scalar_lea.hbm %s1, %s21
      %s23 = sshll.u32 [#allocation5], 4
      %s24 = int_to_ptr.vmem [resolvable:$true] %s23
      %29 = dma.hbm_to_vmem [thread:$0]  %s22, 256, %s24, [#allocation6], 128, 128, 8
    $region5: #{tpu_custom_call.1} parent=1 // pred_fallthru
      _
    // Predicated region
    $region6: #{tpu_custom_call.1} parent=1 // pred_check
      _
    $region7: #{tpu_custom_call.1} parent=1 // pred_check_branch
      %31 = sbr.rel (0) target = $region9
    $region8: #{tpu_custom_call.1} parent=1 // pred_region
      %s32 = sadd.s32 0, 0
      %p33 = scmp.lt.s32.totalorder %s32, 0
      %s34 = scalar_select %p33, %s32, 0
      %s35 = smul.u32 2, %s34
      %s37 = ssub.s32 256, 256
      %38 = vsyncadd [#allocation9], %s37
      %s39 = smul.addr %s35, 128
      %s40 = scalar_lea.hbm %s2, %s39
      %s41 = sshll.u32 [#allocation8], 4
      %s42 = int_to_ptr.vmem [resolvable:$true] %s41
      %47 = dma.hbm_to_vmem [thread:$0]  %s40, 256, %s42, [#allocation9], 128, 128, 8
    $region9: #{tpu_custom_call.1} parent=1 // pred_fallthru
      _
    // Predicated region
    $region10: #{tpu_custom_call.1} parent=1 // pred_check
      _
    $region11: #{tpu_custom_call.1} parent=1 // pred_check_branch
      %49 = sbr.rel (0) target = $region13
    $region12: #{tpu_custom_call.1} parent=1 // pred_region
      %50 = dma.done [#allocation6], 256
    $region13: #{tpu_custom_call.1} parent=1 // pred_fallthru
      _
    // Predicated region
    $region14: #{tpu_custom_call.1} parent=1 // pred_check
      _
    $region15: #{tpu_custom_call.1} parent=1 // pred_check_branch
      %52 = sbr.rel (0) target = $region17
    $region16: #{tpu_custom_call.1} parent=1 // pred_region
      %53 = dma.done [#allocation9], 256
    $region17: #{tpu_custom_call.1} parent=1 // pred_fallthru
      _
    %s54 = sadd.s32 0, 0
    %p55 = scmp.lt.s32.totalorder %s54, 0
    %s56 = scalar_select %p55, %s54, 0
    %s57 = smul.u32 2, %s56
    %s58 = sadd.s32 0, 0
    %p59 = scmp.lt.s32.totalorder %s58, 0
    %s60 = scalar_select %p59, %s58, 0
    %s61 = smul.u32 2, %s60
    %p62 = scmp.eq.s32.totalorder 0, 0
    // Predicated region
    $region18: #{tpu_custom_call.1} parent=1 // pred_check
      %p63 = pneg %p62
    $region19: #{tpu_custom_call.1} parent=1 // pred_check_branch
      %65 = sbr.rel (%p63) target = $region21
    $region20: #{tpu_custom_call.1} parent=1 // pred_region
      %66 = vst [vmem:[#allocation2] sm:$0xff] 0.0
    $region21: #{tpu_custom_call.1} parent=1 // pred_fallthru
      _
    %v67 = vld [vmem:[#allocation5] sm:$0xff]
    %v68 = vld [vmem:[#allocation5 + $0x8] sm:$0xff]
    %v69 = vld [vmem:[#allocation8] sm:$0xff]
    %v70 = vld [vmem:[#allocation8 + $0x8] sm:$0xff]
    %v71 = vsub.f32 %v69, %v67
    %v72 = vsub.f32 %v70, %v68
    %v73 = vmul.f32 %v69, 1.442695
    %v74 = vpow.pop %v73
    %v75 = vmul.f32 %v70, 1.442695
    %v76 = vpow.pop %v75
    %v77 = vmul.f32 %v71, %v74
    %v78 = vmul.f32 %v72, %v76
    %s79 = sadd.s32 0, 0
    %v80 = vlaneseq
    %v81 = vshrl.u32 %v80, 7
    %v82 = vadd.s32 %v81, 8
    %v83 = vlaneseq
    %v84 = vand.u32 %v83, 127
    %s85 = smul.u32 %s79, 16
    %v86 = vstv %s85
    %v87 = vadd.s32 %v86, %v81
    %v88 = vadd.s32 %v86, %v82
    %v89 = vmul.u32 %v87, 128
    %v90 = vmul.u32 %v88, 128
    %v91 = vadd.s32 %v89, %v84
    %v92 = vadd.s32 %v90, %v84
    %s93 = sld [smem:[#allocation4]]
    %v94 = vstv %s93
    %vm95 = vcmp.lt.s32.totalorder %v91, %v94
    %vm96 = vcmp.lt.s32.totalorder %v92, %v94
    %v97 = vsel %vm95, %v77, 0.0
    %v98 = vsel %vm96, %v78, 0.0
    %v99 = vld [vmem:[#allocation2] sm:$0xff]
    %v100 = vadd.f32 %v97, %v98
    %v101 = vadd.f32 %v99, %v100
    %102 = vst [vmem:[#allocation2] sm:$0xff] %v101
    // Predicated region
    $region22: #{tpu_custom_call.1} parent=1 // pred_check
      %p103 = pneg %p62
    $region23: #{tpu_custom_call.1} parent=1 // pred_check_branch
      %105 = sbr.rel (%p103) target = $region25
    $region24: #{tpu_custom_call.1} parent=1 // pred_region
      %v106 = vld [vmem:[#allocation2] sm:$0xff]
      %107 = vst [vmem:[#allocation10] sm:$0xff] %v106
    $region25: #{tpu_custom_call.1} parent=1 // pred_fallthru
      _
    // Predicated region
    $region26: #{tpu_custom_call.1} parent=1 // pred_check
      _
    $region27: #{tpu_custom_call.1} parent=1 // pred_check_branch
      %109 = sbr.rel (0) target = $region29
    $region28: #{tpu_custom_call.1} parent=1 // pred_region
      %s111 = ssub.s32 128, 128
      %112 = vsyncadd [#allocation7], %s111
      %s114 = sshll.u32 [#allocation10], 4
      %s115 = int_to_ptr.vmem [resolvable:$true] %s114
      %117 = dma.vmem_to_hbm [thread:$0]  %s115, 128, %s3, [#allocation7]
    $region29: #{tpu_custom_call.1} parent=1 // pred_fallthru
      _
    // Predicated region
    $region30: #{tpu_custom_call.1} parent=1 // pred_check
      _
    $region31: #{tpu_custom_call.1} parent=1 // pred_check_branch
      %119 = sbr.rel (0) target = $region33
    $region32: #{tpu_custom_call.1} parent=1 // pred_region
      %120 = dma.done [#allocation7], 128
    $region33: #{tpu_custom_call.1} parent=1 // pred_fallthru
      _
    %121 = vsyncpa [#allocation6], 1
    %122 = vsyncpa [#allocation9], 1
    %123 = vsyncpa [#allocation7], 1

</llo_original>
